<compile_context>
chip_gen: v5e
topology: v5e:2x2
jax: 0.10.0
libtpu: 0.0.40
codegen_flags: <defaults>
</compile_context>

<pallas_src>
import jax
import jax.numpy as jnp
from jax.experimental import pallas as pl
from jax.experimental.pallas import tpu as pltpu


def _round_up(a: int, m: int) -> int:
    return (a + m - 1) // m * m


def ffm_kernel(x_ref, s_ref, w_ref, b_ref, o_ref):
    # x_ref : (D, TB)  streamed xT tile (batch in lanes), f32 or bf16
    # s_ref : (D, D)   resident strict-upper interaction matrix, same dtype as x
    # w_ref : (D, 1)   resident linear weights, f32 (broadcast over lanes)
    # b_ref : (1, 1)   bias scalar in SMEM, f32
    # o_ref : (1, TB)  lane-dense sigmoid outputs for this tile, f32
    x = x_ref[...]                                                     # (D, TB)
    # MXU matmul, dense N = TB lanes, f32 accumulation.
    t = jnp.dot(s_ref[...], x, preferred_element_type=jnp.float32)    # (D, TB) f32
    # Post-matmul elementwise math in f32 (v5e has no bf16 VPU/EUP path).
    xf = x.astype(jnp.float32)
    logits = jnp.sum(xf * (t + w_ref[...]), axis=0, keepdims=True)    # (1, TB)
    logits = logits + b_ref[0, 0]
    o_ref[...] = jax.nn.sigmoid(logits).astype(o_ref.dtype)


def ffm_forward(x, w, b, v, field_indices, *, compute_dtype=jnp.float32,
                max_tile=32768):
    """x: (B, D), w: (D, 1), b: (1, 1), v: (F, D, K), field_indices: (D,) int32.

    compute_dtype: dtype of the streamed MXU operands (xT, S_upper). Use
    jnp.bfloat16 on v6e/v7x to halve HBM traffic (f32 accumulation is kept).
    """
    B, D = x.shape

    # ---- batch-invariant prep (tiny, pure JAX glue; hoisted out of the hot loop) ----
    v_sel = v[field_indices, jnp.arange(D), :]                              # (D, K)
    s = jnp.dot(v_sel, v_sel.T, precision=jax.lax.Precision.HIGHEST)        # (D, D)
    row = jax.lax.broadcasted_iota(jnp.int32, (D, D), 0)
    col = jax.lax.broadcasted_iota(jnp.int32, (D, D), 1)
    s_upper = jnp.where(col > row, s, 0.0).astype(compute_dtype)            # keep i < j
    w_col = w.astype(jnp.float32).reshape(D, 1)                              # (D, 1)
    b_sc = b.astype(jnp.float32).reshape(1, 1)                               # (1, 1)

    # ---- batch-in-lanes layout: transpose + pad batch to a lane-friendly multiple ----
    B_lanes = _round_up(max(B, 1), 128)
    TB = min(max_tile, B_lanes)
    # Aim for >= 2 grid steps (v7x megacore) whenever the batch allows it.
    while B_lanes // TB < 2 and TB > 128:
        TB = _round_up(TB // 2, 128)
    B_pad = _round_up(B_lanes, TB)
    num_tiles = B_pad // TB

    # Single small producer pass: transpose(+cast)+pad of x only (no augmented copy).
    xT = jnp.pad(x.T.astype(compute_dtype), ((0, 0), (0, B_pad - B)))       # (D, B_pad)

    itemsize = jnp.dtype(compute_dtype).itemsize
    cost = pl.CostEstimate(
        flops=2 * B_pad * D * D + 3 * B_pad * D,
        transcendentals=B_pad,                               # one sigmoid per row
        bytes_accessed=B_pad * D * itemsize + D * D * itemsize
        + D * 4 + 4 + B_pad * 4,
    )

    out = pl.pallas_call(
        ffm_kernel,
        out_shape=jax.ShapeDtypeStruct((num_tiles, TB), jnp.float32),
        grid=(num_tiles,),
        in_specs=[
            pl.BlockSpec((D, TB), lambda i: (0, i)),         # streamed xT tile
            pl.BlockSpec((D, D), lambda i: (0, 0)),          # resident S_upper
            pl.BlockSpec((D, 1), lambda i: (0, 0)),          # resident linear weights
            pl.BlockSpec(memory_space=pltpu.MemorySpace.SMEM),  # bias scalar
        ],
        out_specs=pl.BlockSpec((1, TB), lambda i: (i, 0)),   # lane-dense output block
        compiler_params=pltpu.CompilerParams(
            dimension_semantics=("parallel",),               # shard batch across TCs (v7x)
        ),
        cost_estimate=cost,
    )(xT, s_upper, w_col, b_sc)

    # (num_tiles, TB) row-major == batch order; drop padded rows.
    return out.reshape(B_pad, 1)[:B]


def ffm_reference(x, w, b, v, field_indices):
    """Pure-JAX reference mirroring the PyTorch loop exactly."""
    B, D = x.shape
    linear = x @ w + b[0, 0]
    interaction = jnp.zeros((B,), jnp.float32)
    for i in range(D):
        for j in range(i + 1, D):
            vi = v[field_indices[i], i]
            vj = v[field_indices[j], j]
            interaction = interaction + jnp.sum(vi * vj) * x[:, i] * x[:, j]
    return jax.nn.sigmoid(linear + interaction[:, None])


if __name__ == "__main__":
    key = jax.random.PRNGKey(0)
    k_x, k_w, k_b, k_v = jax.random.split(key, 4)

    # Small shapes consistent with the module.
    batch = 8
    input_dim = 16
    num_fields = 4
    k_dim = 8

    x = jax.random.normal(k_x, (batch, input_dim), dtype=jnp.float32)
    # nn.Linear(input_dim, 1): weight (1, input_dim), bias (1,). Store as (D,1) / (1,1).
    w = jax.random.normal(k_w, (input_dim, 1), dtype=jnp.float32) * 0.1
    b = jax.random.normal(k_b, (1, 1), dtype=jnp.float32) * 0.1
    # v: (num_fields, input_dim, k) ~ randn * 0.01
    v = jax.random.normal(k_v, (num_fields, input_dim, k_dim), dtype=jnp.float32) * 0.01
    # Deterministic field assignment for each feature index.
    field_indices = (jnp.arange(input_dim) % num_fields).astype(jnp.int32)

    ref = ffm_reference(x, w, b, v, field_indices)

    # f32 path: exact match with the PyTorch/JAX reference.
    out = ffm_forward(x, w, b, v, field_indices)
    out = jax.block_until_ready(out)
    assert out.shape == (batch, 1)
    assert jnp.allclose(out, ref, atol=1e-5, rtol=1e-5), (out, ref)

    # bf16 streamed-operand path (v6e/v7x HBM-traffic optimization): f32 accumulation,
    # relaxed tolerance per review.
    out_bf16 = ffm_forward(x, w, b, v, field_indices, compute_dtype=jnp.bfloat16)
    out_bf16 = jax.block_until_ready(out_bf16)
    assert out_bf16.shape == (batch, 1)
    assert jnp.allclose(out_bf16, ref, atol=2e-2, rtol=2e-2), (out_bf16, ref)

    print("KERNEL_OK")
</pallas_src>

<mosaic_0001>
module attributes {stable_mosaic.version = 11 : i64} {
  func.func @ffm_kernel(%arg0: i32, %arg1: memref<16x128xf32, #tpu.memory_space<vmem>>, %arg2: memref<16x16xf32, #tpu.memory_space<vmem>>, %arg3: memref<16x1xf32, #tpu.memory_space<vmem>>, %arg4: memref<1x1xf32, #tpu.memory_space<smem>>, %arg5: memref<1x128xf32, #tpu.memory_space<vmem>>) attributes {dimension_semantics = [#tpu.dimension_semantics<parallel>], iteration_bounds = array<i64: 1>, scalar_prefetch = 0 : i64, scratch_operands = 0 : i64, tpu.core_type = #tpu.core_type<tc>, window_params = [{transform_indices = @transform_0, window_bounds = array<i64: 16, 128>}, {pipeline_mode = #tpu.pipeline_mode<synchronous>, transform_indices = @transform_1, window_bounds = array<i64: 16, 16>}, {pipeline_mode = #tpu.pipeline_mode<synchronous>, transform_indices = @transform_2, window_bounds = array<i64: 16, 1>}, {transform_indices = @transform_3, window_bounds = array<i64: 1, 1>}, {transform_indices = @transform_4, window_bounds = array<i64: 1, 128>}]} {
    %c0 = arith.constant 0 : index
    %c0_0 = arith.constant 0 : index
    %0 = vector.load %arg1[%c0, %c0_0] : memref<16x128xf32, #tpu.memory_space<vmem>>, vector<16x128xf32>
    %c0_1 = arith.constant 0 : index
    %c0_2 = arith.constant 0 : index
    %1 = vector.load %arg2[%c0_1, %c0_2] : memref<16x16xf32, #tpu.memory_space<vmem>>, vector<16x16xf32>
    %cst = arith.constant dense<0.000000e+00> : vector<16x128xf32>
    %2 = tpu.matmul %1, %0, %cst {dimension_numbers = #tpu.dot_dimension_numbers<[1], [0], [0], [1], [0, 0, 1, 1], [], []>} : vector<16x16xf32>, vector<16x128xf32>, vector<16x128xf32> -> vector<16x128xf32>
    %c0_3 = arith.constant 0 : index
    %c0_4 = arith.constant 0 : index
    %3 = vector.load %arg3[%c0_3, %c0_4] : memref<16x1xf32, #tpu.memory_space<vmem>>, vector<16x1xf32>
    %4 = vector.broadcast %3 : vector<16x1xf32> to vector<16x128xf32>
    %5 = arith.addf %2, %4 : vector<16x128xf32>
    %6 = arith.mulf %0, %5 : vector<16x128xf32>
    %cst_5 = arith.constant dense<0.000000e+00> : vector<128xf32>
    %7 = vector.multi_reduction <add>, %6, %cst_5 [0] : vector<16x128xf32> to vector<128xf32>
    %8 = vector.shape_cast %7 : vector<128xf32> to vector<1x128xf32>
    %c0_6 = arith.constant 0 : index
    %c0_7 = arith.constant 0 : index
    %9 = memref.load %arg4[%c0_6, %c0_7] : memref<1x1xf32, #tpu.memory_space<smem>>
    %10 = vector.broadcast %9 : f32 to vector<1x128xf32>
    %11 = arith.addf %8, %10 : vector<1x128xf32>
    %12 = arith.negf %11 : vector<1x128xf32>
    %13 = math.exp %12 : vector<1x128xf32>
    %cst_8 = arith.constant 1.000000e+00 : f32
    %14 = vector.broadcast %cst_8 : f32 to vector<1x128xf32>
    %15 = arith.addf %14, %13 : vector<1x128xf32>
    %16 = arith.divf %14, %15 : vector<1x128xf32>
    %c0_9 = arith.constant 0 : index
    %c0_10 = arith.constant 0 : index
    %17 = vector.load %arg5[%c0_9, %c0_10] : memref<1x128xf32, #tpu.memory_space<vmem>>, vector<1x128xf32>
    tpu.vector_store %arg5[%c0_9, %c0_10], %16 {strides = array<i32>} : memref<1x128xf32, #tpu.memory_space<vmem>>, vector<1x128xf32>,
    return
  }
  func.func @transform_0(%arg0: i32) -> (i32, i32) {
    %c0_i32 = arith.constant 0 : i32
    %c0_i32_0 = arith.constant 0 : i32
    return %c0_i32, %arg0 : i32, i32
  }
  func.func @transform_1(%arg0: i32) -> (i32, i32) {
    %c0_i32 = arith.constant 0 : i32
    %c0_i32_0 = arith.constant 0 : i32
    %c0_i32_1 = arith.constant 0 : i32
    return %c0_i32, %c0_i32_0 : i32, i32
  }
  func.func @transform_2(%arg0: i32) -> (i32, i32) {
    %c0_i32 = arith.constant 0 : i32
    %c0_i32_0 = arith.constant 0 : i32
    %c0_i32_1 = arith.constant 0 : i32
    return %c0_i32, %c0_i32_0 : i32, i32
  }
  func.func @transform_3(%arg0: i32) -> (i32, i32) {
    %c0_i32 = arith.constant 0 : i32
    %c0_i32_0 = arith.constant 0 : i32
    %c0_i32_1 = arith.constant 0 : i32
    return %c0_i32, %c0_i32_0 : i32, i32
  }
  func.func @transform_4(%arg0: i32) -> (i32, i32) {
    %c0_i32 = arith.constant 0 : i32
    %c0_i32_0 = arith.constant 0 : i32
    return %arg0, %c0_i32 : i32, i32
  }
}

</mosaic_0001>

<llo_original>
// kernel: tpu_custom_call.1
$region0: #{tpu_custom_call.1}
  #allocation0 [shape = 'u32[]', space=smem, size = 0x4, offset = 0x4, fixed_abs, tag = 'smem constant byte address 0x4 - core index']
  #allocation1 [shape = 'u32[72,128]{1,0:T(1,128)}', space=vmem, size = 0x9000, scoped, tag = 'internal scratch']
  #allocation2 [shape = 'f32[1,1]{1,0:T(1,128)S(6)}', space=smem, size = 0x200, scoped, tag = 'scoped memory for tpu_custom_call.1']
  %s0 = inlined_call_operand.vmem [shape: f32[16,128], index: 0, kind: input, shape index: {}]
  %s1 = inlined_call_operand.hbm [shape: f32[16,16], index: 1, kind: input, shape index: {}]
  %s2 = inlined_call_operand.vmem [shape: f32[16,1], index: 2, kind: input, shape index: {}]
  %s3 = inlined_call_operand.<no memory space> [shape: f32[1,1], index: 3, kind: input, shape index: {}]
  %s4 = inlined_call_operand.hbm [shape: f32[1,128], index: 4, kind: output, shape index: {}]
  %s5 = sld [smem:[#allocation0]]
  $region30: #{tpu_custom_call.1} parent=0
    _
  %s7 = ssub.s32 1, %s5
  %s8 = scalar_select 0, %s7, %s5
  %9 = sst [smem:[#allocation2]] %s3
  $region1: #{tpu_custom_call.1} parent=0
    #allocation3 [shape = 'u8[8192]{0}', space=vmem, size = 0x2000, scoped, tag = 'input window, operand 1, single buffered']
    #allocation4 [shape = 's32[1]{0}', space=sflag, size = 0x4, scoped, tag = 'scoped memory for tpu_custom_call.1']
    #allocation5 [shape = 's32[1]{0}', space=sflag, size = 0x4, scoped, tag = 'scoped memory for tpu_custom_call.1']
    #allocation6 [shape = 'u8[512]{0}', space=vmem, size = 0x400, scoped, tag = 'output window, operand 0, single buffered']
    %10 = vsyncpa [#allocation4], 0
    %11 = vsyncpa [#allocation5], 0
    // Predicated region
    $region2: #{tpu_custom_call.1} parent=1 // pred_check
      _
    $region3: #{tpu_custom_call.1} parent=1 // pred_check_branch
      %13 = sbr.rel (0) target = $region5
    $region4: #{tpu_custom_call.1} parent=1 // pred_region
      _
    $region5: #{tpu_custom_call.1} parent=1 // pred_fallthru
      _
    // Predicated region
    $region6: #{tpu_custom_call.1} parent=1 // pred_check
      _
    $region7: #{tpu_custom_call.1} parent=1 // pred_check_branch
      %15 = sbr.rel (0) target = $region9
    $region8: #{tpu_custom_call.1} parent=1 // pred_region
      %17 = vsyncadd [#allocation4], 0
      %s18 = sshll.u32 %s1, 4
      %s19 = int_to_ptr.hbm [resolvable:$true] %s18
      %s20 = sshll.u32 [#allocation3], 4
      %s21 = int_to_ptr.vmem [resolvable:$true] %s20
      %26 = dma.hbm_to_vmem [thread:$0]  %s19, 256, %s21, [#allocation4], 128, 128, 8
    $region9: #{tpu_custom_call.1} parent=1 // pred_fallthru
      _
    // Predicated region
    $region10: #{tpu_custom_call.1} parent=1 // pred_check
      _
    $region11: #{tpu_custom_call.1} parent=1 // pred_check_branch
      %28 = sbr.rel (0) target = $region13
    $region12: #{tpu_custom_call.1} parent=1 // pred_region
      _
    $region13: #{tpu_custom_call.1} parent=1 // pred_fallthru
      _
    // Predicated region
    $region14: #{tpu_custom_call.1} parent=1 // pred_check
      _
    $region15: #{tpu_custom_call.1} parent=1 // pred_check_branch
      %30 = sbr.rel (0) target = $region17
    $region16: #{tpu_custom_call.1} parent=1 // pred_region
      _
    $region17: #{tpu_custom_call.1} parent=1 // pred_fallthru
      _
    // Predicated region
    $region18: #{tpu_custom_call.1} parent=1 // pred_check
      _
    $region19: #{tpu_custom_call.1} parent=1 // pred_check_branch
      %32 = sbr.rel (0) target = $region21
    $region20: #{tpu_custom_call.1} parent=1 // pred_region
      %34 = dma.done [#allocation4], 256
    $region21: #{tpu_custom_call.1} parent=1 // pred_fallthru
      _
    %v35 = vld [vmem:[%s0] sm:$0xff]
    %v36 = vld [vmem:[%s0 + $0x8] sm:$0xff]
    %v37 = vld [vmem:[#allocation3] sm:$0xff]
    %v38 = vld [vmem:[#allocation3 + $0x8] sm:$0xff]
    %v39 = vld [vmem:[%s2] sm:$0xff]
    %v40 = vld [vmem:[%s2 + $0x8] sm:$0xff]
    %42 = vset.pattern.permute.xlu0 0
    %43 = vperm.xlu0 %42, %v39
    %v44 = vpop.permute.xlu0 %43
    %47 = vset.pattern.permute.xlu0 0
    %48 = vperm.xlu0 %47, %v40
    %v49 = vpop.permute.xlu0 %48
    %vm51 = vcmask 130048
    %v53 = vsel %vm51, %v37, 0
    %v56 = vsel %vm51, %v38, 0
    %58 = vmatpush.msra.mxu0 0.0
    %59 = vmatpush.msra.mxu0 0.0
    %60 = vmatpush.msra.mxu0 0.0
    %61 = vmatpush.msra.mxu0 0.0
    %62 = vmatpush.msra.mxu0 0.0
    %63 = vmatpush.msra.mxu0 0.0
    %64 = vmatpush.msra.mxu0 0.0
    %65 = vmatpush.msra.mxu0 0.0
    %66 = vmatpush.msra.mxu0 0.0
    %67 = vmatpush.msra.mxu0 0.0
    %68 = vmatpush.msra.mxu0 0.0
    %69 = vmatpush.msra.mxu0 0.0
    %70 = vmatpush.msra.mxu0 0.0
    %71 = vmatpush.msra.mxu0 0.0
    %72 = vmatpush.msra.mxu0 %v36
    %73 = vmatpush.msra.mxu0 %v35
    %74 = vmatmul.f32.gmra.mxu0 %v53
    %v75 = vpop.f32.mrf.mxu0
    %v76 = vadd.f32 %v44, %v75
    %77 = vmatmul.f32.gmra.mxu0 %v56
    %v78 = vpop.f32.mrf.mxu0
    %v79 = vadd.f32 %v49, %v78
    %80 = vdwg.mxu0
    %v81 = vmul.f32 %v35, %v76
    %v82 = vmul.f32 %v36, %v79
    %v83 = vadd.f32 %v81, %v82
    %v84 = vrot.slane %v83, 4
    %v85 = vadd.f32 %v83, %v84
    %v86 = vrot.slane %v85, 2
    %v87 = vadd.f32 %v85, %v86
    %v88 = vrot.slane %v87, 1
    %v89 = vadd.f32 %v87, %v88
    %s90 = sld [smem:[#allocation2]]
    %v91 = vstv %s90
    %v92 = vadd.f32 %v89, %v91
    %v93 = vxor.u32 %v92, 2147483648
    %v94 = vmul.f32 %v93, 1.442695
    %v95 = vpow.pop %v94
    %v96 = vadd.f32 %v95, 1.0
    %v97 = vrcp.pop %v96
    %v98 = vmul.f32 %v96, %v97
    %v99 = vsub.f32 1.0, %v98
    %v100 = vmul.f32 %v97, %v99
    %v101 = vadd.f32 %v97, %v100
    %vm102 = vweird.f32 %v96
    %vm103 = vweird.f32 %v97
    %vm104 = vmor %vm102, %vm103
    %v105 = vsel %vm104, %v97, %v101
    %v106 = vand.u32 2147483647, %v96
    %vm107 = vcmp.eq.f32.partialorder %v106, 8.507059e+37
    %v108 = vand.u32 %v96, 2147483648
    %v109 = vor.u32 1.1754944e-38, %v108
    %v110 = vsel %vm107, %v109, %v105
    %v111 = vmul.f32 1.0, %v110
    %112 = vst [vmem:[#allocation6] sm:$0x1] %v111
    // Predicated region
    $region22: #{tpu_custom_call.1} parent=1 // pred_check
      _
    $region23: #{tpu_custom_call.1} parent=1 // pred_check_branch
      %114 = sbr.rel (0) target = $region25
    $region24: #{tpu_custom_call.1} parent=1 // pred_region
      %116 = vsyncadd [#allocation5], 0
      %s118 = sshll.u32 [#allocation6], 4
      %s119 = int_to_ptr.vmem [resolvable:$true] %s118
      %s120 = sshll.u32 %s4, 4
      %s121 = int_to_ptr.hbm [resolvable:$true] %s120
      %123 = dma.vmem_to_hbm [thread:$0]  %s119, 16, %s121, [#allocation5]
    $region25: #{tpu_custom_call.1} parent=1 // pred_fallthru
      _
    // Predicated region
    $region26: #{tpu_custom_call.1} parent=1 // pred_check
      _
    $region27: #{tpu_custom_call.1} parent=1 // pred_check_branch
      %125 = sbr.rel (0) target = $region29
    $region28: #{tpu_custom_call.1} parent=1 // pred_region
      %127 = dma.done [#allocation5], 16
    $region29: #{tpu_custom_call.1} parent=1 // pred_fallthru
      _
    %128 = vsyncpa [#allocation4], 1
    %129 = vsyncpa [#allocation5], 1

</llo_original>
